<compile_context>
chip_gen: v7x
topology: tpu7x:2x2x1
jax: 0.10.0
libtpu: 0.0.40
codegen_flags: <defaults>
</compile_context>

<pallas_src>
import functools

import jax
import jax.numpy as jnp
from jax import lax
from jax.experimental import pallas as pl
from jax.experimental.pallas import tpu as pltpu

_TILE_C = 128                      # column tile (lane-dense, MXU-native)
_TILE_VMEM_BUDGET = 28 << 20       # double-buffered input-block cap (v7x-safe)


def _neg_sim_kernel(zr_ref, zc_ref, neg_ref, *, nr, r_sub, tile_c, temperature):
    """Accumulates sum_{i != j, i,j < Bp} softplus(z_i . z_j - T).

    Grid (nr, n_half, r_sub):
      axis 0 ("parallel") : row super-block i   (tile_r = r_sub * tile_c rows)
      axis 1 ("arbitrary"): wrapped column offset jo -> col super-block (i+jo)%nr
      axis 2 ("arbitrary"): column sub-tile js inside that super-block
    Symmetry: off-diagonal super-block pairs are visited once (weight 2); the
    self super-block and, for even nr, the wrap-around middle column are each
    visited from both sides / contain the diagonal and get weight 1.
    """
    jo = pl.program_id(1)
    js = pl.program_id(2)

    # First visit for this row block -> zero the resident [8,128] accumulator.
    @pl.when((jo == 0) & (js == 0))
    def _():
        neg_ref[...] = jnp.zeros_like(neg_ref)

    # Per-column-super-block symmetry weight (scalar).
    if nr % 2 == 0:
        w = jnp.where((jo == 0) | (jo == nr // 2), 1.0, 2.0).astype(jnp.float32)
    else:
        w = jnp.where(jo == 0, 1.0, 2.0).astype(jnp.float32)

    zc = zc_ref[...]                                    # [tile_c, Dp] bf16
    neg_t = jnp.float32(-temperature)

    for r in range(r_sub):                              # static, small (<=4)
        zr = zr_ref[pl.ds(r * tile_c, tile_c), :]       # [tile_c, Dp] bf16
        # Single bf16 MXU pass, f32 accumulation.
        s = lax.dot_general(zr, zc, (((1,), (1,)), ((), ())),
                            preferred_element_type=jnp.float32)
        shifted = s + neg_t                             # [tile_c, tile_c] f32
        is_self = (jo == 0) & (js == r)                 # sub-tile with the diagonal

        @pl.when(jnp.logical_not(is_self))              # hot path: no masks
        def _():
            neg = jnp.log(1.0 + jnp.exp(shifted))
            neg_ref[...] += w * jnp.sum(neg.reshape(-1, 8, 128), axis=0)

        @pl.when(is_self)                               # once per 128 diag rows
        def _():
            diag = (lax.broadcasted_iota(jnp.int32, (tile_c, tile_c), 0)
                    == lax.broadcasted_iota(jnp.int32, (tile_c, tile_c), 1))
            # Mask BEFORE the exp (f32): exp(-1e30)=0 -> log(1+0)=0.
            neg = jnp.log(1.0 + jnp.exp(jnp.where(diag, -1e30, shifted)))
            neg_ref[...] += jnp.sum(neg.reshape(-1, 8, 128), axis=0)


def _pick_tile_r(bp0, dp):
    """Largest row tile in {128,256,512} keeping >=2 row blocks (megacore /
    v7x 2-TC) and the double-buffered input blocks under the VMEM budget."""
    tile_r = 128
    for t in (256, 512):
        fits_vmem = 2 * (t + _TILE_C) * dp * 2 <= _TILE_VMEM_BUDGET
        if 2 * t <= bp0 and fits_vmem:
            tile_r = t
    return tile_r


def intra_modal_loss(emb, temperature=0.2, hyper_gamma=0.5, *, tile_r=None):
    """emb: [B, D] float array. Returns scalar loss (float32).

    NOTE: like the PyTorch module, B == 1 divides by B*(B-1) == 0.
    """
    B, D = emb.shape
    temperature = float(temperature)
    hyper_gamma = float(hyper_gamma)

    # ---- hoisted out of the kernel: row-normalize once, in f32 -------------
    x = emb.astype(jnp.float32)
    nrm2 = jnp.sum(x * x, axis=1, keepdims=True)
    z = x * lax.rsqrt(jnp.maximum(nrm2, 1e-24))         # == x / max(||x||,1e-12)

    # Positives term (diagonal of the cosine-similarity matrix) in plain JAX.
    zn2 = jnp.sum(z * z, axis=1)                        # ~1, or 0 for zero rows
    sim_pos = zn2 / jnp.maximum(zn2, 1e-8)
    pos_sum = jnp.sum(jnp.log(1.0 + jnp.exp(temperature - sim_pos))) / B

    # ---- tiling / padding ---------------------------------------------------
    Dp = 128 * pl.cdiv(D, 128)
    Bp0 = 128 * pl.cdiv(B, 128)
    if tile_r is None:
        tile_r = _pick_tile_r(Bp0, Dp)
    assert tile_r % _TILE_C == 0, "tile_r must be a multiple of 128"
    Bp = tile_r * pl.cdiv(B, tile_r)
    r_sub = tile_r // _TILE_C
    nr = Bp // tile_r
    n_half = (nr + 2) // 2                              # ceil((nr+1)/2)

    # bf16 feed: halves column-stream HBM traffic, full-rate MXU. Zero padding
    # keeps padded rows exactly zero (their dot products are exactly zero).
    zb = jnp.pad(z.astype(jnp.bfloat16), ((0, Bp - B), (0, Dp - D)))

    kernel = functools.partial(_neg_sim_kernel, nr=nr, r_sub=r_sub,
                               tile_c=_TILE_C, temperature=temperature)

    in_block_bytes = 2 * (tile_r + _TILE_C) * Dp * 2    # double-buffered bf16
    # <= 48 MiB keeps headroom on v7x (64 MiB physical); raise on v5e/v6e if
    # using bigger row tiles.
    vmem_limit = int(min(48 << 20, max(32 << 20, 2 * in_block_bytes)))

    neg_part = pl.pallas_call(
        kernel,
        out_shape=jax.ShapeDtypeStruct((nr, 8, 128), jnp.float32),
        grid=(nr, n_half, r_sub),
        in_specs=[
            # Row super-block: resident across the inner (arbitrary) axes.
            pl.BlockSpec((tile_r, Dp), lambda i, jo, js: (i, 0)),
            # Column tile: wrapped symmetric schedule.
            pl.BlockSpec((_TILE_C, Dp),
                         lambda i, jo, js: (((i + jo) % nr) * r_sub + js, 0)),
        ],
        out_specs=pl.BlockSpec((None, 8, 128), lambda i, jo, js: (i, 0, 0)),
        compiler_params=pltpu.CompilerParams(
            dimension_semantics=("parallel", "arbitrary", "arbitrary"),
            vmem_limit_bytes=vmem_limit,
        ),
    )(zb, zb)

    # kernel_sum = sum_{i != j, i,j < Bp} softplus(z_i.z_j - T).  Every
    # off-diagonal pair touching a padded (exact-zero) row contributes exactly
    # softplus(0 - T); subtract those analytically instead of masking in-kernel.
    kernel_sum = jnp.sum(neg_part)
    pad_pairs = Bp * (Bp - 1) - B * (B - 1)
    softplus_neg_t = jnp.log(1.0 + jnp.exp(jnp.float32(-temperature)))
    neg_valid = kernel_sum - pad_pairs * softplus_neg_t
    neg_sum = neg_valid / (B * (B - 1))

    loss = hyper_gamma * pos_sum + (1.0 - hyper_gamma) * neg_sum
    return loss.astype(jnp.float32)


def _reference_loss(emb, temperature=0.2, hyper_gamma=0.5):
    """Pure-JAX reference matching the PyTorch forward."""
    B = emb.shape[0]
    xn = jnp.linalg.norm(emb, axis=1, keepdims=True)
    z = emb / jnp.maximum(xn, 1e-12)
    zn = jnp.linalg.norm(z, axis=1, keepdims=True)
    sim = (z @ z.T) / jnp.maximum(zn * zn.T, 1e-8)
    eye = jnp.eye(B, dtype=bool)
    sim_pos = jnp.diag(sim)
    pos = jnp.log(1.0 + jnp.exp(-sim_pos + temperature))
    neg = jnp.log(1.0 + jnp.where(eye, 0.0, jnp.exp(sim - temperature)))
    pos_sum = jnp.sum(pos) / B
    neg_sum = jnp.sum(neg) / (B * (B - 1))
    return hyper_gamma * pos_sum + (1.0 - hyper_gamma) * neg_sum


if __name__ == "__main__":
    key = jax.random.PRNGKey(0)

    # Case 1: small module-spec shape (single 128 tile, heavy padding).
    emb = jax.random.normal(key, (8, 32), dtype=jnp.float32)
    loss = jax.block_until_ready(intra_modal_loss(emb, 0.2, 0.5))
    ref = _reference_loss(emb, 0.2, 0.5)
    assert jnp.allclose(loss, ref, atol=2e-3, rtol=2e-3), (loss, ref)

    # Case 2: even nr (2x2 super-blocks) -> exercises the wrap-around middle
    # column of the symmetric schedule plus row/col padding correction.
    emb2 = jax.random.normal(jax.random.PRNGKey(1), (200, 48), dtype=jnp.float32)
    loss2 = jax.block_until_ready(intra_modal_loss(emb2, 0.2, 0.5))
    ref2 = _reference_loss(emb2, 0.2, 0.5)
    assert jnp.allclose(loss2, ref2, atol=2e-3, rtol=2e-3), (loss2, ref2)

    # Case 3: odd nr with an asymmetric 256-row tile -> exercises the
    # sub-chunk loop, the weight-2 symmetric path and diagonal sub-tiles.
    emb3 = jax.random.normal(jax.random.PRNGKey(2), (600, 192), dtype=jnp.float32)
    loss3 = jax.block_until_ready(intra_modal_loss(emb3, 0.2, 0.5))
    ref3 = _reference_loss(emb3, 0.2, 0.5)
    assert jnp.allclose(loss3, ref3, atol=2e-3, rtol=2e-3), (loss3, ref3)

    print("KERNEL_OK")
</pallas_src>

<mosaic_0001>
module attributes {stable_mosaic.version = 11 : i64} {
  func.func @_neg_sim_kernel(%arg0: i32, %arg1: i32, %arg2: i32, %arg3: memref<128x128xbf16, #tpu.memory_space<vmem>>, %arg4: memref<128x128xbf16, #tpu.memory_space<vmem>>, %arg5: memref<1x8x128xf32, #tpu.memory_space<vmem>>) attributes {dimension_semantics = [#tpu.dimension_semantics<parallel>, #tpu.dimension_semantics<arbitrary>, #tpu.dimension_semantics<arbitrary>], iteration_bounds = array<i64: 1, 1, 1>, scalar_prefetch = 0 : i64, scratch_operands = 0 : i64, tpu.core_type = #tpu.core_type<tc>, window_params = [{transform_indices = @transform_0, window_bounds = array<i64: 128, 128>}, {transform_indices = @transform_1, window_bounds = array<i64: 128, 128>}, {transform_indices = @transform_2, window_bounds = array<i64: 1, 8, 128>}]} {
    %c0_i32 = arith.constant 0 : i32
    %0 = arith.cmpi eq, %arg1, %c0_i32 : i32
    %c0_i32_0 = arith.constant 0 : i32
    %1 = arith.cmpi eq, %arg2, %c0_i32_0 : i32
    %2 = arith.andi %0, %1 : i1
    %3 = arith.extui %2 : i1 to i32
    %c0_i32_1 = arith.constant 0 : i32
    %4 = arith.cmpi ne, %3, %c0_i32_1 : i32
    scf.if %4 {
      %cst_13 = arith.constant 0.000000e+00 : f32
      %20 = vector.broadcast %cst_13 : f32 to vector<8x128xf32>
      %c0_14 = arith.constant 0 : index
      %c0_15 = arith.constant 0 : index
      %c0_16 = arith.constant 0 : index
      %21 = vector.load %arg5[%c0_14, %c0_15, %c0_16] : memref<1x8x128xf32, #tpu.memory_space<vmem>>, vector<1x8x128xf32>
      %22 = vector.shape_cast %21 : vector<1x8x128xf32> to vector<8x128xf32>
      %23 = vector.shape_cast %20 : vector<8x128xf32> to vector<1x8x128xf32>
      tpu.vector_store %arg5[%c0_14, %c0_15, %c0_16], %23 {strides = array<i32>} : memref<1x8x128xf32, #tpu.memory_space<vmem>>, vector<1x8x128xf32>,
    } else {
    }
    %c0_i32_2 = arith.constant 0 : i32
    %5 = arith.cmpi eq, %arg1, %c0_i32_2 : i32
    %cst = arith.constant 1.000000e+00 : f32
    %cst_3 = arith.constant 2.000000e+00 : f32
    %6 = arith.select %5, %cst, %cst_3 : f32
    %c0 = arith.constant 0 : index
    %c0_4 = arith.constant 0 : index
    %7 = vector.load %arg4[%c0, %c0_4] : memref<128x128xbf16, #tpu.memory_space<vmem>>, vector<128x128xbf16>
    %c0_5 = arith.constant 0 : index
    %c0_6 = arith.constant 0 : index
    %8 = vector.load %arg3[%c0_5, %c0_6] : memref<128x128xbf16, #tpu.memory_space<vmem>>, vector<128x128xbf16>
    %cst_7 = arith.constant dense<0.000000e+00> : vector<128x128xf32>
    %9 = tpu.matmul %8, %7, %cst_7 {dimension_numbers = #tpu.dot_dimension_numbers<[1], [1], [0], [0], [0, 0, 1, 0], [], []>} : vector<128x128xbf16>, vector<128x128xbf16>, vector<128x128xf32> -> vector<128x128xf32>
    %cst_8 = arith.constant -2.000000e-01 : f32
    %10 = vector.broadcast %cst_8 : f32 to vector<128x128xf32>
    %11 = arith.addf %9, %10 : vector<128x128xf32>
    %c0_i32_9 = arith.constant 0 : i32
    %12 = arith.cmpi eq, %arg1, %c0_i32_9 : i32
    %c0_i32_10 = arith.constant 0 : i32
    %13 = arith.cmpi eq, %arg2, %c0_i32_10 : i32
    %14 = arith.andi %12, %13 : i1
    %true = arith.constant true
    %15 = arith.xori %14, %true : i1
    %16 = arith.extui %15 : i1 to i32
    %c0_i32_11 = arith.constant 0 : i32
    %17 = arith.cmpi ne, %16, %c0_i32_11 : i32
    scf.if %17 {
      %20 = math.exp %11 : vector<128x128xf32>
      %cst_13 = arith.constant 1.000000e+00 : f32
      %21 = vector.broadcast %cst_13 : f32 to vector<128x128xf32>
      %22 = arith.addf %21, %20 : vector<128x128xf32>
      %23 = math.log %22 : vector<128x128xf32>
      %c0_14 = arith.constant 0 : index
      %c0_15 = arith.constant 0 : index
      %c0_16 = arith.constant 0 : index
      %24 = vector.load %arg5[%c0_14, %c0_15, %c0_16] : memref<1x8x128xf32, #tpu.memory_space<vmem>>, vector<1x8x128xf32>
      %25 = vector.shape_cast %24 : vector<1x8x128xf32> to vector<8x128xf32>
      %26 = vector.shape_cast %23 : vector<128x128xf32> to vector<16x8x128xf32>
      %cst_17 = arith.constant dense<0.000000e+00> : vector<8x128xf32>
      %27 = vector.multi_reduction <add>, %26, %cst_17 [0] : vector<16x8x128xf32> to vector<8x128xf32>
      %28 = vector.broadcast %6 : f32 to vector<8x128xf32>
      %29 = arith.mulf %28, %27 : vector<8x128xf32>
      %30 = arith.addf %25, %29 : vector<8x128xf32>
      %c0_18 = arith.constant 0 : index
      %c0_19 = arith.constant 0 : index
      %c0_20 = arith.constant 0 : index
      %31 = vector.load %arg5[%c0_18, %c0_19, %c0_20] : memref<1x8x128xf32, #tpu.memory_space<vmem>>, vector<1x8x128xf32>
      %32 = vector.shape_cast %31 : vector<1x8x128xf32> to vector<8x128xf32>
      %33 = vector.shape_cast %30 : vector<8x128xf32> to vector<1x8x128xf32>
      tpu.vector_store %arg5[%c0_18, %c0_19, %c0_20], %33 {strides = array<i32>} : memref<1x8x128xf32, #tpu.memory_space<vmem>>, vector<1x8x128xf32>,
    } else {
    }
    %18 = arith.extui %14 : i1 to i32
    %c0_i32_12 = arith.constant 0 : i32
    %19 = arith.cmpi ne, %18, %c0_i32_12 : i32
    scf.if %19 {
      %20 = tpu.iota {dimensions = array<i32: 0>} : vector<128x128xi32>
      %21 = tpu.iota {dimensions = array<i32: 1>} : vector<128x128xi32>
      %22 = arith.cmpi eq, %20, %21 : vector<128x128xi32>
      %cst_13 = arith.constant -1.000000e+30 : f32
      %23 = vector.broadcast %cst_13 : f32 to vector<128x128xf32>
      %24 = arith.select %22, %23, %11 : vector<128x128xi1>, vector<128x128xf32>
      %25 = math.exp %24 : vector<128x128xf32>
      %cst_14 = arith.constant 1.000000e+00 : f32
      %26 = vector.broadcast %cst_14 : f32 to vector<128x128xf32>
      %27 = arith.addf %26, %25 : vector<128x128xf32>
      %28 = math.log %27 : vector<128x128xf32>
      %c0_15 = arith.constant 0 : index
      %c0_16 = arith.constant 0 : index
      %c0_17 = arith.constant 0 : index
      %29 = vector.load %arg5[%c0_15, %c0_16, %c0_17] : memref<1x8x128xf32, #tpu.memory_space<vmem>>, vector<1x8x128xf32>
      %30 = vector.shape_cast %29 : vector<1x8x128xf32> to vector<8x128xf32>
      %31 = vector.shape_cast %28 : vector<128x128xf32> to vector<16x8x128xf32>
      %cst_18 = arith.constant dense<0.000000e+00> : vector<8x128xf32>
      %32 = vector.multi_reduction <add>, %31, %cst_18 [0] : vector<16x8x128xf32> to vector<8x128xf32>
      %33 = arith.addf %30, %32 : vector<8x128xf32>
      %c0_19 = arith.constant 0 : index
      %c0_20 = arith.constant 0 : index
      %c0_21 = arith.constant 0 : index
      %34 = vector.load %arg5[%c0_19, %c0_20, %c0_21] : memref<1x8x128xf32, #tpu.memory_space<vmem>>, vector<1x8x128xf32>
      %35 = vector.shape_cast %34 : vector<1x8x128xf32> to vector<8x128xf32>
      %36 = vector.shape_cast %33 : vector<8x128xf32> to vector<1x8x128xf32>
      tpu.vector_store %arg5[%c0_19, %c0_20, %c0_21], %36 {strides = array<i32>} : memref<1x8x128xf32, #tpu.memory_space<vmem>>, vector<1x8x128xf32>,
    } else {
    }
    return
  }
  func.func @transform_0(%arg0: i32, %arg1: i32, %arg2: i32) -> (i32, i32) {
    %c0_i32 = arith.constant 0 : i32
    %c0_i32_0 = arith.constant 0 : i32
    return %arg0, %c0_i32 : i32, i32
  }
  func.func @transform_1(%arg0: i32, %arg1: i32, %arg2: i32) -> (i32, i32) {
    %0 = arith.addi %arg0, %arg1 : i32
    %c1_i32 = arith.constant 1 : i32
    %c0_i32 = arith.constant 0 : i32
    %1 = arith.cmpi eq, %c1_i32, %c0_i32 : i32
    %c1_i32_0 = arith.constant 1 : i32
    %2 = arith.select %1, %c1_i32_0, %c1_i32 : i32
    %3 = arith.remsi %0, %2 : i32
    %c0_i32_1 = arith.constant 0 : i32
    %4 = arith.cmpi ne, %3, %c0_i32_1 : i32
    %c0_i32_2 = arith.constant 0 : i32
    %5 = arith.cmpi slt, %3, %c0_i32_2 : i32
    %c0_i32_3 = arith.constant 0 : i32
    %6 = arith.cmpi slt, %2, %c0_i32_3 : i32
    %7 = arith.xori %5, %6 : i1
    %8 = arith.andi %7, %4 : i1
    %9 = arith.addi %3, %2 : i32
    %10 = arith.select %8, %9, %3 : i32
    %c1_i32_4 = arith.constant 1 : i32
    %11 = arith.muli %10, %c1_i32_4 : i32
    %12 = arith.addi %11, %arg2 : i32
    %c0_i32_5 = arith.constant 0 : i32
    %c0_i32_6 = arith.constant 0 : i32
    return %12, %c0_i32_5 : i32, i32
  }
  func.func @transform_2(%arg0: i32, %arg1: i32, %arg2: i32) -> (i32, i32, i32) {
    %c0_i32 = arith.constant 0 : i32
    %c0_i32_0 = arith.constant 0 : i32
    %c0_i32_1 = arith.constant 0 : i32
    return %arg0, %c0_i32, %c0_i32_0 : i32, i32, i32
  }
}

</mosaic_0001>

<llo_original>
// kernel: tpu_custom_call.1
$region0: #{tpu_custom_call.1}
  #allocation0 [shape = 'u32[]', space=smem, size = 0x4, offset = 0x4, fixed_abs, tag = 'smem constant byte address 0x4 - core index']
  #allocation1 [shape = 'u32[144,128]{1,0:T(1,128)}', space=vmem, size = 0x12000, scoped, tag = 'internal scratch']
  %s0 = inlined_call_operand.hbm [shape: bf16[128,128], index: 0, kind: input, shape index: {}]
  %s1 = inlined_call_operand.hbm [shape: bf16[128,128], index: 1, kind: input, shape index: {}]
  %s2 = inlined_call_operand.hbm [shape: f32[1,8,128], index: 2, kind: output, shape index: {}]
  %s3 = sld [smem:[#allocation0]]
  $region38: #{tpu_custom_call.1} parent=0
    _
  %s5 = ssub.s32 1, %s3
  %s6 = scalar_select 0, %s5, %s3
  $region1: #{tpu_custom_call.1} parent=0
    #allocation2 [shape = 'u8[32768]{0}', space=vmem, size = 0x8000, scoped, tag = 'input window, operand 0, single buffered']
    #allocation3 [shape = 's32[1]{0}', space=sflag, size = 0x4, scoped, tag = 'scoped memory for tpu_custom_call.1']
    #allocation4 [shape = 's32[1]{0}', space=sflag, size = 0x4, scoped, tag = 'scoped memory for tpu_custom_call.1']
    #allocation5 [shape = 'u8[32768]{0}', space=vmem, size = 0x8000, scoped, tag = 'input window, operand 1, single buffered']
    #allocation6 [shape = 's32[1]{0}', space=sflag, size = 0x4, scoped, tag = 'scoped memory for tpu_custom_call.1']
    #allocation7 [shape = 'u8[4096]{0}', space=vmem, size = 0x1000, scoped, tag = 'output window, operand 0, single buffered']
    %7 = vsyncpa [#allocation3], 0
    %8 = vsyncpa [#allocation6], 0
    %9 = vsyncpa [#allocation4], 0
    // Predicated region
    $region2: #{tpu_custom_call.1} parent=1 // pred_check
      _
    $region3: #{tpu_custom_call.1} parent=1 // pred_check_branch
      %11 = sbr.rel (0) target = $region5
    $region4: #{tpu_custom_call.1} parent=1 // pred_region
      %s13 = ssub.s32 1024, 1024
      %14 = vsyncadd [#allocation3], %s13
      %s15 = sshll.u32 [#allocation2], 4
      %s16 = int_to_ptr.vmem [resolvable:$true] %s15
      %21 = dma.hbm_to_vmem [thread:$0]  %s0, 1024, %s16, [#allocation3], 64, 64, 4
    $region5: #{tpu_custom_call.1} parent=1 // pred_fallthru
      _
    // Predicated region
    $region6: #{tpu_custom_call.1} parent=1 // pred_check
      _
    $region7: #{tpu_custom_call.1} parent=1 // pred_check_branch
      %23 = sbr.rel (0) target = $region9
    $region8: #{tpu_custom_call.1} parent=1 // pred_region
      %s25 = ssub.s32 1024, 1024
      %26 = vsyncadd [#allocation6], %s25
      %s27 = sshll.u32 [#allocation5], 4
      %s28 = int_to_ptr.vmem [resolvable:$true] %s27
      %33 = dma.hbm_to_vmem [thread:$0]  %s1, 1024, %s28, [#allocation6], 64, 64, 4
    $region9: #{tpu_custom_call.1} parent=1 // pred_fallthru
      _
    // Predicated region
    $region10: #{tpu_custom_call.1} parent=1 // pred_check
      _
    $region11: #{tpu_custom_call.1} parent=1 // pred_check_branch
      %35 = sbr.rel (0) target = $region13
    $region12: #{tpu_custom_call.1} parent=1 // pred_region
      %36 = dma.done [#allocation3], 1024
    $region13: #{tpu_custom_call.1} parent=1 // pred_fallthru
      _
    // Predicated region
    $region14: #{tpu_custom_call.1} parent=1 // pred_check
      _
    $region15: #{tpu_custom_call.1} parent=1 // pred_check_branch
      %38 = sbr.rel (0) target = $region17
    $region16: #{tpu_custom_call.1} parent=1 // pred_region
      %39 = dma.done [#allocation6], 1024
    $region17: #{tpu_custom_call.1} parent=1 // pred_fallthru
      _
    %p41 = scmp.eq.s32.totalorder 0, 0
    %p42 = scmp.eq.s32.totalorder 0, 0
    %p43 = pnand %p41, %p42
    %p44 = pneg %p43
    // Predicated region
    $region18: #{tpu_custom_call.1} parent=1 // pred_check
      _
    $region19: #{tpu_custom_call.1} parent=1 // pred_check_branch
      %46 = sbr.rel (%p43) target = $region21
    $region20: #{tpu_custom_call.1} parent=1 // pred_region
      %47 = vst [vmem:[#allocation7] sm:$0xff] 0.0
    $region21: #{tpu_custom_call.1} parent=1 // pred_fallthru
      _
    %s48 = scalar_select %p41, 1.0, 2.0
    %v49 = vld [vmem:[#allocation5] sm:$0xf]
    %v50 = vld [vmem:[#allocation5 + $0x4] sm:$0xf]
    %v51 = vld [vmem:[#allocation5 + $0x8] sm:$0xf]
    %v52 = vld [vmem:[#allocation5 + $0xc] sm:$0xf]
    %v53 = vld [vmem:[#allocation5 + $0x10] sm:$0xf]
    %v54 = vld [vmem:[#allocation5 + $0x14] sm:$0xf]
    %v55 = vld [vmem:[#allocation5 + $0x18] sm:$0xf]
    %v56 = vld [vmem:[#allocation5 + $0x1c] sm:$0xf]
    %v57 = vld [vmem:[#allocation5 + $0x20] sm:$0xf]
    %v58 = vld [vmem:[#allocation5 + $0x24] sm:$0xf]
    %v59 = vld [vmem:[#allocation5 + $0x28] sm:$0xf]
    %v60 = vld [vmem:[#allocation5 + $0x2c] sm:$0xf]
    %v61 = vld [vmem:[#allocation5 + $0x30] sm:$0xf]
    %v62 = vld [vmem:[#allocation5 + $0x34] sm:$0xf]
    %v63 = vld [vmem:[#allocation5 + $0x38] sm:$0xf]
    %v64 = vld [vmem:[#allocation5 + $0x3c] sm:$0xf]
    %v65 = vld [vmem:[#allocation2] sm:$0xf]
    %v66 = vld [vmem:[#allocation2 + $0x4] sm:$0xf]
    %v67 = vld [vmem:[#allocation2 + $0x8] sm:$0xf]
    %v68 = vld [vmem:[#allocation2 + $0xc] sm:$0xf]
    %v69 = vld [vmem:[#allocation2 + $0x10] sm:$0xf]
    %v70 = vld [vmem:[#allocation2 + $0x14] sm:$0xf]
    %v71 = vld [vmem:[#allocation2 + $0x18] sm:$0xf]
    %v72 = vld [vmem:[#allocation2 + $0x1c] sm:$0xf]
    %v73 = vld [vmem:[#allocation2 + $0x20] sm:$0xf]
    %v74 = vld [vmem:[#allocation2 + $0x24] sm:$0xf]
    %v75 = vld [vmem:[#allocation2 + $0x28] sm:$0xf]
    %v76 = vld [vmem:[#allocation2 + $0x2c] sm:$0xf]
    %v77 = vld [vmem:[#allocation2 + $0x30] sm:$0xf]
    %v78 = vld [vmem:[#allocation2 + $0x34] sm:$0xf]
    %v79 = vld [vmem:[#allocation2 + $0x38] sm:$0xf]
    %v80 = vld [vmem:[#allocation2 + $0x3c] sm:$0xf]
    %v97 = vunpack.c.l.b16 %v65
    %v98 = vunpack.c.l.b16 %v66
    %v99 = vunpack.c.l.b16 %v67
    %v100 = vunpack.c.l.b16 %v68
    %v101 = vunpack.c.l.b16 %v69
    %v102 = vunpack.c.l.b16 %v70
    %v103 = vunpack.c.l.b16 %v71
    %v104 = vunpack.c.l.b16 %v72
    %v105 = vunpack.c.l.b16 %v73
    %v106 = vunpack.c.l.b16 %v74
    %v107 = vunpack.c.l.b16 %v75
    %v108 = vunpack.c.l.b16 %v76
    %v109 = vunpack.c.l.b16 %v77
    %v110 = vunpack.c.l.b16 %v78
    %v111 = vunpack.c.l.b16 %v79
    %v112 = vunpack.c.l.b16 %v80
    %v113 = vpack.c.b16 %v98, %v97
    %v114 = vpack.c.b16 %v100, %v99
    %v115 = vpack.c.b16 %v102, %v101
    %v116 = vpack.c.b16 %v104, %v103
    %v117 = vpack.c.b16 %v106, %v105
    %v118 = vpack.c.b16 %v108, %v107
    %v119 = vpack.c.b16 %v110, %v109
    %v120 = vpack.c.b16 %v112, %v111
    %v145 = vunpack.c.l.b16 %v49
    %v146 = vunpack.c.l.b16 %v50
    %v147 = vunpack.c.l.b16 %v51
    %v148 = vunpack.c.l.b16 %v52
    %v149 = vunpack.c.l.b16 %v53
    %v150 = vunpack.c.l.b16 %v54
    %v151 = vunpack.c.l.b16 %v55
    %v152 = vunpack.c.l.b16 %v56
    %v153 = vunpack.c.l.b16 %v57
    %v154 = vunpack.c.l.b16 %v58
    %v155 = vunpack.c.l.b16 %v59
    %v156 = vunpack.c.l.b16 %v60
    %v157 = vunpack.c.l.b16 %v61
    %v158 = vunpack.c.l.b16 %v62
    %v159 = vunpack.c.l.b16 %v63
    %v160 = vunpack.c.l.b16 %v64
    %v161 = vpack.c.b16 %v146, %v145
    %v162 = vpack.c.b16 %v148, %v147
    %v163 = vpack.c.b16 %v150, %v149
    %v164 = vpack.c.b16 %v152, %v151
    %v165 = vpack.c.b16 %v154, %v153
    %v166 = vpack.c.b16 %v156, %v155
    %v167 = vpack.c.b16 %v158, %v157
    %v168 = vpack.c.b16 %v160, %v159
    %177 = vmatprep.subr.bf16.mxu0 0
    %178 = vmatpush1.bf16.xpose.msra.mxu0 %v161
    %179 = vmatprep.subr.bf16.mxu0 0
    %180 = vmatpush1.bf16.xpose.msra.mxu0 %v162
    %181 = vmatprep.subr.bf16.mxu0 0
    %182 = vmatpush1.bf16.xpose.msra.mxu0 %v163
    %183 = vmatprep.subr.bf16.mxu0 0
    %184 = vmatpush1.bf16.xpose.msra.mxu0 %v164
    %185 = vmatprep.subr.bf16.mxu0 0
    %186 = vmatpush1.bf16.xpose.msra.mxu0 %v165
    %187 = vmatprep.subr.bf16.mxu0 0
    %188 = vmatpush1.bf16.xpose.msra.mxu0 %v166
    %189 = vmatprep.subr.bf16.mxu0 0
    %190 = vmatpush1.bf16.xpose.msra.mxu0 %v167
    %191 = vmatprep.subr.bf16.mxu0 0
    %192 = vmatpush1.bf16.xpose.msra.mxu0 %v168
    %193 = vmatprep.subr.bf16.mxu0 0
    %194 = vmatpush1.bf16.xpose.msra.mxu0 0
    %195 = vmatprep.subr.bf16.mxu0 0
    %196 = vmatpush1.bf16.xpose.msra.mxu0 0
    %197 = vmatprep.subr.bf16.mxu0 0
    %198 = vmatpush1.bf16.xpose.msra.mxu0 0
    %199 = vmatprep.subr.bf16.mxu0 0
    %200 = vmatpush1.bf16.xpose.msra.mxu0 0
    %201 = vmatprep.subr.bf16.mxu0 0
    %202 = vmatpush1.bf16.xpose.msra.mxu0 0
    %203 = vmatprep.subr.bf16.mxu0 0
    %204 = vmatpush1.bf16.xpose.msra.mxu0 0
    %205 = vmatprep.subr.bf16.mxu0 0
    %206 = vmatpush1.bf16.xpose.msra.mxu0 0
    %207 = vmatprep.subr.bf16.mxu0 0
    %208 = vmatpush1.bf16.xpose.msra.mxu0 0
    %209 = vmatprep.mubr.bf16.mxu0 0
    %210 = vmatmul.mubr.bf16.gmra.mrb[0].mxu0 %v113
    %v211 = vpop.f32.mrb[0].mxu0
    %v212 = vadd.f32 -0.2, %v211
    %v213 = vpop.f32.mrb[0].mxu0
    %v214 = vpop.f32.mrb[0].mxu0
    %v215 = vadd.f32 -0.2, %v214
    %v216 = vpop.f32.mrb[0].mxu0
    %217 = vmatprep.mubr.bf16.mxu0 0
    %218 = vmatmul.mubr.bf16.gmra.mrb[0].mxu0 %v114
    %v219 = vpop.f32.mrb[0].mxu0
    %v220 = vadd.f32 -0.2, %v219
    %v221 = vpop.f32.mrb[0].mxu0
    %v222 = vpop.f32.mrb[0].mxu0
    %v223 = vadd.f32 -0.2, %v222
    %v224 = vpop.f32.mrb[0].mxu0
    %225 = vmatprep.mubr.bf16.mxu0 0
    %226 = vmatmul.mubr.bf16.gmra.mrb[0].mxu0 %v115
    %v227 = vpop.f32.mrb[0].mxu0
    %v228 = vadd.f32 -0.2, %v227
    %v229 = vpop.f32.mrb[0].mxu0
    %v230 = vpop.f32.mrb[0].mxu0
    %v231 = vadd.f32 -0.2, %v230
    %v232 = vpop.f32.mrb[0].mxu0
    %233 = vmatprep.mubr.bf16.mxu0 0
    %234 = vmatmul.mubr.bf16.gmra.mrb[0].mxu0 %v116
    %v235 = vpop.f32.mrb[0].mxu0
    %v236 = vadd.f32 -0.2, %v235
    %v237 = vpop.f32.mrb[0].mxu0
    %v238 = vpop.f32.mrb[0].mxu0
    %v239 = vadd.f32 -0.2, %v238
    %v240 = vpop.f32.mrb[0].mxu0
    %241 = vmatprep.mubr.bf16.mxu0 0
    %242 = vmatmul.mubr.bf16.gmra.mrb[0].mxu0 %v117
    %v243 = vpop.f32.mrb[0].mxu0
    %v244 = vadd.f32 -0.2, %v243
    %v245 = vpop.f32.mrb[0].mxu0
    %v246 = vpop.f32.mrb[0].mxu0
    %v247 = vadd.f32 -0.2, %v246
    %v248 = vpop.f32.mrb[0].mxu0
    %249 = vmatprep.mubr.bf16.mxu0 0
    %250 = vmatmul.mubr.bf16.gmra.mrb[0].mxu0 %v118
    %v251 = vpop.f32.mrb[0].mxu0
    %v252 = vadd.f32 -0.2, %v251
    %v253 = vpop.f32.mrb[0].mxu0
    %v254 = vpop.f32.mrb[0].mxu0
    %v255 = vadd.f32 -0.2, %v254
    %v256 = vpop.f32.mrb[0].mxu0
    %257 = vmatprep.mubr.bf16.mxu0 0
    %258 = vmatmul.mubr.bf16.gmra.mrb[0].mxu0 %v119
    %v259 = vpop.f32.mrb[0].mxu0
    %v260 = vadd.f32 -0.2, %v259
    %v261 = vpop.f32.mrb[0].mxu0
    %v262 = vpop.f32.mrb[0].mxu0
    %v263 = vadd.f32 -0.2, %v262
    %v264 = vpop.f32.mrb[0].mxu0
    %265 = vmatprep.mubr.bf16.mxu0 0
    %266 = vmatmul.mubr.bf16.gmra.mrb[0].mxu0 %v120
    %v267 = vpop.f32.mrb[0].mxu0
    %v268 = vadd.f32 -0.2, %v267
    %v269 = vpop.f32.mrb[0].mxu0
    %v270 = vpop.f32.mrb[0].mxu0
    %v271 = vadd.f32 -0.2, %v270
    %v272 = vpop.f32.mrb[0].mxu0
    %273 = vdwg.mxu0
    // Predicated region
    $region22: #{tpu_custom_call.1} parent=1 // pred_check
      _
    $region23: #{tpu_custom_call.1} parent=1 // pred_check_branch
      %275 = sbr.rel (%p43) target = $region25
    $region24: #{tpu_custom_call.1} parent=1 // pred_region
      %v276 = vlaneseq
      %v277 = vshrl.u32 %v276, 7
      %v278 = vadd.s32 %v277, 8
      %v279 = vadd.s32 %v277, 16
      %v280 = vadd.s32 %v277, 24
      %v281 = vadd.s32 %v277, 32
      %v282 = vadd.s32 %v277, 40
      %v283 = vadd.s32 %v277, 48
      %v284 = vadd.s32 %v277, 56
      %v285 = vadd.s32 %v277, 64
      %v286 = vadd.s32 %v277, 72
      %v287 = vadd.s32 %v277, 80
      %v288 = vadd.s32 %v277, 88
      %v289 = vadd.s32 %v277, 96
      %v290 = vadd.s32 %v277, 104
      %v291 = vadd.s32 %v277, 112
      %v292 = vadd.s32 %v277, 120
      %v293 = vlaneseq
      %v294 = vand.u32 %v293, 127
      %vm295 = vcmp.eq.s32.totalorder %v277, %v294
      %vm296 = vcmp.eq.s32.totalorder %v278, %v294
      %vm297 = vcmp.eq.s32.totalorder %v279, %v294
      %vm298 = vcmp.eq.s32.totalorder %v280, %v294
      %vm299 = vcmp.eq.s32.totalorder %v281, %v294
      %vm300 = vcmp.eq.s32.totalorder %v282, %v294
      %vm301 = vcmp.eq.s32.totalorder %v283, %v294
      %vm302 = vcmp.eq.s32.totalorder %v284, %v294
      %vm303 = vcmp.eq.s32.totalorder %v285, %v294
      %vm304 = vcmp.eq.s32.totalorder %v286, %v294
      %vm305 = vcmp.eq.s32.totalorder %v287, %v294
      %vm306 = vcmp.eq.s32.totalorder %v288, %v294
      %vm307 = vcmp.eq.s32.totalorder %v289, %v294
      %vm308 = vcmp.eq.s32.totalorder %v290, %v294
      %vm309 = vcmp.eq.s32.totalorder %v291, %v294
      %vm310 = vcmp.eq.s32.totalorder %v292, %v294
      %v311 = vsel %vm295, -1e+30, %v212
      %v312 = vsel %vm296, -1e+30, %v215
      %v313 = vsel %vm297, -1e+30, %v220
      %v314 = vsel %vm298, -1e+30, %v223
      %v315 = vsel %vm299, -1e+30, %v228
      %v316 = vsel %vm300, -1e+30, %v231
      %v317 = vsel %vm301, -1e+30, %v236
      %v318 = vsel %vm302, -1e+30, %v239
      %v319 = vsel %vm303, -1e+30, %v244
      %v320 = vsel %vm304, -1e+30, %v247
      %v321 = vsel %vm305, -1e+30, %v252
      %v322 = vsel %vm306, -1e+30, %v255
      %v323 = vsel %vm307, -1e+30, %v260
      %v324 = vsel %vm308, -1e+30, %v263
      %v325 = vsel %vm309, -1e+30, %v268
      %v326 = vsel %vm310, -1e+30, %v271
      %v327 = vmul.f32 %v311, 1.442695
      %v328 = vpow.pop %v327
      %v329 = vmul.f32 %v312, 1.442695
      %v330 = vpow.pop %v329
      %v331 = vmul.f32 %v313, 1.442695
      %v332 = vpow.pop %v331
      %v333 = vmul.f32 %v314, 1.442695
      %v334 = vpow.pop %v333
      %v335 = vmul.f32 %v315, 1.442695
      %v336 = vpow.pop %v335
      %v337 = vmul.f32 %v316, 1.442695
      %v338 = vpow.pop %v337
      %v339 = vmul.f32 %v317, 1.442695
      %v340 = vpow.pop %v339
      %v341 = vmul.f32 %v318, 1.442695
      %v342 = vpow.pop %v341
      %v343 = vmul.f32 %v319, 1.442695
      %v344 = vpow.pop %v343
      %v345 = vmul.f32 %v320, 1.442695
      %v346 = vpow.pop %v345
      %v347 = vmul.f32 %v321, 1.442695
      %v348 = vpow.pop %v347
      %v349 = vmul.f32 %v322, 1.442695
      %v350 = vpow.pop %v349
      %v351 = vmul.f32 %v323, 1.442695
      %v352 = vpow.pop %v351
      %v353 = vmul.f32 %v324, 1.442695
      %v354 = vpow.pop %v353
      %v355 = vmul.f32 %v325, 1.442695
      %v356 = vpow.pop %v355
      %v357 = vmul.f32 %v326, 1.442695
      %v358 = vpow.pop %v357
      %v359 = vadd.f32 %v328, 1.0
      %v360 = vadd.f32 %v330, 1.0
      %v361 = vadd.f32 %v332, 1.0
      %v362 = vadd.f32 %v334, 1.0
      %v363 = vadd.f32 %v336, 1.0
      %v364 = vadd.f32 %v338, 1.0
      %v365 = vadd.f32 %v340, 1.0
      %v366 = vadd.f32 %v342, 1.0
      %v367 = vadd.f32 %v344, 1.0
      %v368 = vadd.f32 %v346, 1.0
      %v369 = vadd.f32 %v348, 1.0
      %v370 = vadd.f32 %v350, 1.0
      %v371 = vadd.f32 %v352, 1.0
      %v372 = vadd.f32 %v354, 1.0
      %v373 = vadd.f32 %v356, 1.0
      %v374 = vadd.f32 %v358, 1.0
      %v375 = vlog2.pop %v359
      %v376 = vmul.f32 %v375, 0.6931472
      %v377 = vlog2.pop %v360
      %v378 = vmul.f32 %v377, 0.6931472
      %v379 = vlog2.pop %v361
      %v380 = vmul.f32 %v379, 0.6931472
      %v381 = vlog2.pop %v362
      %v382 = vmul.f32 %v381, 0.6931472
      %v383 = vlog2.pop %v363
      %v384 = vmul.f32 %v383, 0.6931472
      %v385 = vlog2.pop %v364
      %v386 = vmul.f32 %v385, 0.6931472
      %v387 = vlog2.pop %v365
      %v388 = vmul.f32 %v387, 0.6931472
      %v389 = vlog2.pop %v366
      %v390 = vmul.f32 %v389, 0.6931472
      %v391 = vlog2.pop %v367
      %v392 = vmul.f32 %v391, 0.6931472
      %v393 = vlog2.pop %v368
      %v394 = vmul.f32 %v393, 0.6931472
      %v395 = vlog2.pop %v369
      %v396 = vmul.f32 %v395, 0.6931472
      %v397 = vlog2.pop %v370
      %v398 = vmul.f32 %v397, 0.6931472
      %v399 = vlog2.pop %v371
      %v400 = vmul.f32 %v399, 0.6931472
      %v401 = vlog2.pop %v372
      %v402 = vmul.f32 %v401, 0.6931472
      %v403 = vlog2.pop %v373
      %v404 = vmul.f32 %v403, 0.6931472
      %v405 = vlog2.pop %v374
      %v406 = vmul.f32 %v405, 0.6931472
      %v407 = vld [vmem:[#allocation7] sm:$0xff]
      %v408 = vadd.f32 %v376, %v378
      %v409 = vadd.f32 %v408, %v380
      %v410 = vadd.f32 %v409, %v382
      %v411 = vadd.f32 %v410, %v384
      %v412 = vadd.f32 %v411, %v386
      %v413 = vadd.f32 %v412, %v388
      %v414 = vadd.f32 %v413, %v390
      %v415 = vadd.f32 %v414, %v392
      %v416 = vadd.f32 %v415, %v394
      %v417 = vadd.f32 %v416, %v396
      %v418 = vadd.f32 %v417, %v398
      %v419 = vadd.f32 %v418, %v400
      %v420 = vadd.f32 %v419, %v402
      %v421 = vadd.f32 %v420, %v404
      %v422 = vadd.f32 %v421, %v406
      %v423 = vadd.f32 %v407, %v422
      %424 = vst [vmem:[#allocation7] sm:$0xff] %v423
    $region25: #{tpu_custom_call.1} parent=1 // pred_fallthru
      _
    // Predicated region
    $region26: #{tpu_custom_call.1} parent=1 // pred_check
      %p425 = pneg %p43
    $region27: #{tpu_custom_call.1} parent=1 // pred_check_branch
      %427 = sbr.rel (%p425) target = $region29
    $region28: #{tpu_custom_call.1} parent=1 // pred_region
      %v428 = vmul.f32 %v212, 1.442695
      %v429 = vpow.pop %v428
      %v430 = vmul.f32 %v215, 1.442695
      %v431 = vpow.pop %v430
      %v432 = vmul.f32 %v220, 1.442695
      %v433 = vpow.pop %v432
      %v434 = vmul.f32 %v223, 1.442695
      %v435 = vpow.pop %v434
      %v436 = vmul.f32 %v228, 1.442695
      %v437 = vpow.pop %v436
      %v438 = vmul.f32 %v231, 1.442695
      %v439 = vpow.pop %v438
      %v440 = vmul.f32 %v236, 1.442695
      %v441 = vpow.pop %v440
      %v442 = vmul.f32 %v239, 1.442695
      %v443 = vpow.pop %v442
      %v444 = vmul.f32 %v244, 1.442695
      %v445 = vpow.pop %v444
      %v446 = vmul.f32 %v247, 1.442695
      %v447 = vpow.pop %v446
      %v448 = vmul.f32 %v252, 1.442695
      %v449 = vpow.pop %v448
      %v450 = vmul.f32 %v255, 1.442695
      %v451 = vpow.pop %v450
      %v452 = vmul.f32 %v260, 1.442695
      %v453 = vpow.pop %v452
      %v454 = vmul.f32 %v263, 1.442695
      %v455 = vpow.pop %v454
      %v456 = vmul.f32 %v268, 1.442695
      %v457 = vpow.pop %v456
      %v458 = vmul.f32 %v271, 1.442695
      %v459 = vpow.pop %v458
      %v460 = vadd.f32 %v429, 1.0
      %v461 = vadd.f32 %v431, 1.0
      %v462 = vadd.f32 %v433, 1.0
      %v463 = vadd.f32 %v435, 1.0
      %v464 = vadd.f32 %v437, 1.0
      %v465 = vadd.f32 %v439, 1.0
      %v466 = vadd.f32 %v441, 1.0
      %v467 = vadd.f32 %v443, 1.0
      %v468 = vadd.f32 %v445, 1.0
      %v469 = vadd.f32 %v447, 1.0
      %v470 = vadd.f32 %v449, 1.0
      %v471 = vadd.f32 %v451, 1.0
      %v472 = vadd.f32 %v453, 1.0
      %v473 = vadd.f32 %v455, 1.0
      %v474 = vadd.f32 %v457, 1.0
      %v475 = vadd.f32 %v459, 1.0
      %v476 = vlog2.pop %v460
      %v477 = vmul.f32 %v476, 0.6931472
      %v478 = vlog2.pop %v461
      %v479 = vmul.f32 %v478, 0.6931472
      %v480 = vlog2.pop %v462
      %v481 = vmul.f32 %v480, 0.6931472
      %v482 = vlog2.pop %v463
      %v483 = vmul.f32 %v482, 0.6931472
      %v484 = vlog2.pop %v464
      %v485 = vmul.f32 %v484, 0.6931472
      %v486 = vlog2.pop %v465
      %v487 = vmul.f32 %v486, 0.6931472
      %v488 = vlog2.pop %v466
      %v489 = vmul.f32 %v488, 0.6931472
      %v490 = vlog2.pop %v467
      %v491 = vmul.f32 %v490, 0.6931472
      %v492 = vlog2.pop %v468
      %v493 = vmul.f32 %v492, 0.6931472
      %v494 = vlog2.pop %v469
      %v495 = vmul.f32 %v494, 0.6931472
      %v496 = vlog2.pop %v470
      %v497 = vmul.f32 %v496, 0.6931472
      %v498 = vlog2.pop %v471
      %v499 = vmul.f32 %v498, 0.6931472
      %v500 = vlog2.pop %v472
      %v501 = vmul.f32 %v500, 0.6931472
      %v502 = vlog2.pop %v473
      %v503 = vmul.f32 %v502, 0.6931472
      %v504 = vlog2.pop %v474
      %v505 = vmul.f32 %v504, 0.6931472
      %v506 = vlog2.pop %v475
      %v507 = vmul.f32 %v506, 0.6931472
      %v508 = vld [vmem:[#allocation7] sm:$0xff]
      %v509 = vadd.f32 %v477, %v479
      %v510 = vadd.f32 %v509, %v481
      %v511 = vadd.f32 %v510, %v483
      %v512 = vadd.f32 %v511, %v485
      %v513 = vadd.f32 %v512, %v487
      %v514 = vadd.f32 %v513, %v489
      %v515 = vadd.f32 %v514, %v491
      %v516 = vadd.f32 %v515, %v493
      %v517 = vadd.f32 %v516, %v495
      %v518 = vadd.f32 %v517, %v497
      %v519 = vadd.f32 %v518, %v499
      %v520 = vadd.f32 %v519, %v501
      %v521 = vadd.f32 %v520, %v503
      %v522 = vadd.f32 %v521, %v505
      %v523 = vadd.f32 %v522, %v507
      %v524 = vstv %s48
      %v525 = vmul.f32 %v524, %v523
      %v526 = vadd.f32 %v508, %v525
      %527 = vst [vmem:[#allocation7] sm:$0xff] %v526
    $region29: #{tpu_custom_call.1} parent=1 // pred_fallthru
      _
    // Predicated region
    $region30: #{tpu_custom_call.1} parent=1 // pred_check
      _
    $region31: #{tpu_custom_call.1} parent=1 // pred_check_branch
      %529 = sbr.rel (0) target = $region33
    $region32: #{tpu_custom_call.1} parent=1 // pred_region
      %s531 = ssub.s32 128, 128
      %532 = vsyncadd [#allocation4], %s531
      %s534 = sshll.u32 [#allocation7], 4
      %s535 = int_to_ptr.vmem [resolvable:$true] %s534
      %537 = dma.vmem_to_hbm [thread:$0]  %s535, 128, %s2, [#allocation4]
    $region33: #{tpu_custom_call.1} parent=1 // pred_fallthru
      _
    // Predicated region
    $region34: #{tpu_custom_call.1} parent=1 // pred_check
      _
    $region35: #{tpu_custom_call.1} parent=1 // pred_check_branch
      %539 = sbr.rel (0) target = $region37
    $region36: #{tpu_custom_call.1} parent=1 // pred_region
      %540 = dma.done [#allocation4], 128
    $region37: #{tpu_custom_call.1} parent=1 // pred_fallthru
      _
    %541 = vsyncpa [#allocation3], 1
    %542 = vsyncpa [#allocation6], 1
    %543 = vsyncpa [#allocation4], 1

</llo_original>
